<compile_context>
chip_gen: v6e
topology: v6e:2x2x1
jax: 0.10.0
libtpu: 0.0.40
codegen_flags: <defaults>
</compile_context>

<pallas_src>
import jax
import jax.numpy as jnp
from jax import lax
from jax.experimental import pallas as pl
from jax.experimental.pallas import tpu as pltpu


def _round_up(x: int, m: int) -> int:
    return (x + m - 1) // m * m


# Contract the LAST dim of both operands: [M, K] x [N, K] -> [M, N].
# Lets the MXU consume PyTorch's [out, in] Linear weight layout untransposed.
_CONTRACT_LAST = (((1,), (1,)), ((), ()))


def mlp_kernel(x_ref, w1_ref, b1_ref, w2_ref, b2_ref, o_ref):
    cdt = w1_ref.dtype                               # bf16 compute dtype
    # hidden = relu(x @ W1^T + b1): bf16 MXU matmul, f32 accumulation.
    h = lax.dot_general(x_ref[...].astype(cdt), w1_ref[...], _CONTRACT_LAST,
                        preferred_element_type=jnp.float32)
    h = jnp.maximum(h + b1_ref[...], 0.0)            # bias + ReLU in f32 (VPU)
    # out = hidden @ W2^T + b2
    y = lax.dot_general(h.astype(cdt), w2_ref[...], _CONTRACT_LAST,
                        preferred_element_type=jnp.float32)
    o_ref[...] = (y + b2_ref[...]).astype(o_ref.dtype)


def prepare_params(w1, b1, w2, b2, *, compute_dtype=jnp.bfloat16):
    """One-time conversion of PyTorch-layout params into kernel-friendly form.

    Call this ONCE outside the per-step forward so no per-call weight
    transpose / cast / pad pays an HBM round trip.
      w1: [H, F], b1: [H], w2: [O, H], b2: [O]   (torch.nn.Linear layout)
    """
    H, F = w1.shape
    O, H2 = w2.shape
    assert H2 == H
    o_pad = _round_up(O, 128)          # lane-dense output stores (no vst.msk)
    w2p = jnp.pad(w2, ((0, o_pad - O), (0, 0)))
    b2p = jnp.pad(b2, ((0, o_pad - O),))
    return {
        "w1": w1.astype(compute_dtype),                    # [H, F]     bf16
        "b1": b1.reshape(1, H).astype(jnp.float32),        # [1, H]     f32
        "w2": w2p.astype(compute_dtype),                   # [O_pad, H] bf16
        "b2": b2p.reshape(1, o_pad).astype(jnp.float32),   # [1, O_pad] f32
        "n_output": O,
    }


def _pick_block_m(n, f, h, o_pad, w_bytes, vmem_budget=20 * 1024 * 1024):
    """Largest batch tile (128-multiple, or the whole 8-rounded batch when
    small) whose double-buffered activation tiles + resident weights fit a
    conservative VMEM budget (safe for v7x's 64 MiB physical VMEM)."""
    n8 = _round_up(max(n, 1), 8)
    candidates = [t for t in (1024, 512, 256, 128) if t <= n8] or [n8]
    for tm in candidates:
        # 2x double-buffered f32 x/out tiles + f32 hidden + resident weights
        # (counted x2 to stay conservative about Pallas buffering).
        act = 2 * tm * f * 4 + 2 * tm * o_pad * 4 + tm * h * 4
        if act + 2 * w_bytes <= vmem_budget:
            return tm
    # Weights too large to stay fully resident: fall back to the smallest
    # tile. (For truly large MLPs, add a K/H grid axis with an f32
    # accumulator scratch + pl.when init/finalize.)
    return 8


def net_forward(x, params):
    """Pallas forward for Net: relu(x @ W1^T + b1) @ W2^T + b2, x: [N, F]."""
    N, F = x.shape
    w1, b1, w2, b2 = params["w1"], params["b1"], params["w2"], params["b2"]
    H = w1.shape[0]
    o_pad = w2.shape[0]
    O = params["n_output"]

    w_bytes = (w1.size * w1.dtype.itemsize + w2.size * w2.dtype.itemsize
               + (b1.size + b2.size) * 4)
    tm = _pick_block_m(N, F, H, o_pad, w_bytes)

    n_tiles = pl.cdiv(N, tm)
    n_padded = n_tiles * tm
    if n_padded != N:
        x = jnp.pad(x, ((0, n_padded - N), (0, 0)))

    cost = pl.CostEstimate(
        flops=2 * n_padded * (F * H + H * o_pad),
        transcendentals=0,
        bytes_accessed=(x.size * x.dtype.itemsize + w_bytes
                        + n_padded * o_pad * 4),
    )

    out = pl.pallas_call(
        mlp_kernel,
        out_shape=jax.ShapeDtypeStruct((n_padded, o_pad), jnp.float32),
        grid=(n_tiles,),
        in_specs=[
            pl.BlockSpec((tm, F), lambda i: (i, 0)),      # x: tiled over batch
            pl.BlockSpec((H, F), lambda i: (0, 0)),       # W1: resident
            pl.BlockSpec((1, H), lambda i: (0, 0)),       # b1: resident
            pl.BlockSpec((o_pad, H), lambda i: (0, 0)),   # W2: resident
            pl.BlockSpec((1, o_pad), lambda i: (0, 0)),   # b2: resident
        ],
        out_specs=pl.BlockSpec((tm, o_pad), lambda i: (i, 0)),
        compiler_params=pltpu.CompilerParams(
            dimension_semantics=("parallel",),   # megacore-shardable on v7x
        ),
        cost_estimate=cost,
    )(x, w1, b1, w2, b2)

    return out[:N, :O]


if __name__ == "__main__":
    # Small shapes consistent with Net(n_feature, n_hidden, n_output).
    N, F, H, O = 8, 16, 32, 4

    key = jax.random.PRNGKey(0)
    kx, kw1, kb1, kw2, kb2 = jax.random.split(key, 5)

    x = jax.random.normal(kx, (N, F), dtype=jnp.float32)
    # Deterministic synthetic parameters (same shapes as torch.nn.Linear).
    w1 = jax.random.normal(kw1, (H, F), dtype=jnp.float32) * 0.1
    b1 = jax.random.normal(kb1, (H,), dtype=jnp.float32) * 0.1
    w2 = jax.random.normal(kw2, (O, H), dtype=jnp.float32) * 0.1
    b2 = jax.random.normal(kb2, (O,), dtype=jnp.float32) * 0.1

    params = prepare_params(w1, b1, w2, b2)        # one-time layout/dtype prep
    out = jax.block_until_ready(net_forward(x, params))

    # f32 reference (original module semantics).
    ref_f32 = jnp.maximum(x @ w1.T + b1, 0.0) @ w2.T + b2
    # Matched-precision reference (bf16 matmul operands, f32 accumulation).
    xb = x.astype(jnp.bfloat16)
    h = jnp.maximum(
        jnp.dot(xb, w1.astype(jnp.bfloat16).T,
                preferred_element_type=jnp.float32) + b1, 0.0)
    ref_bf16 = jnp.dot(h.astype(jnp.bfloat16), w2.astype(jnp.bfloat16).T,
                       preferred_element_type=jnp.float32) + b2

    assert out.shape == (N, O)
    assert jnp.allclose(out, ref_bf16, atol=5e-3, rtol=5e-3), \
        "mismatch vs matched-precision reference"
    assert jnp.allclose(out, ref_f32, atol=3e-2, rtol=3e-2), \
        "mismatch vs f32 reference"

    print("KERNEL_OK")
</pallas_src>

<mosaic_0001>
module attributes {stable_mosaic.version = 11 : i64} {
  func.func @mlp_kernel(%arg0: i32, %arg1: memref<8x16xf32, #tpu.memory_space<vmem>>, %arg2: memref<32x16xbf16, #tpu.memory_space<vmem>>, %arg3: memref<1x32xf32, #tpu.memory_space<vmem>>, %arg4: memref<128x32xbf16, #tpu.memory_space<vmem>>, %arg5: memref<1x128xf32, #tpu.memory_space<vmem>>, %arg6: memref<8x128xf32, #tpu.memory_space<vmem>>) attributes {dimension_semantics = [#tpu.dimension_semantics<parallel>], iteration_bounds = array<i64: 1>, scalar_prefetch = 0 : i64, scratch_operands = 0 : i64, tpu.core_type = #tpu.core_type<tc>, window_params = [{transform_indices = @transform_0, window_bounds = array<i64: 8, 16>}, {pipeline_mode = #tpu.pipeline_mode<synchronous>, transform_indices = @transform_1, window_bounds = array<i64: 32, 16>}, {pipeline_mode = #tpu.pipeline_mode<synchronous>, transform_indices = @transform_2, window_bounds = array<i64: 1, 32>}, {pipeline_mode = #tpu.pipeline_mode<synchronous>, transform_indices = @transform_3, window_bounds = array<i64: 128, 32>}, {pipeline_mode = #tpu.pipeline_mode<synchronous>, transform_indices = @transform_4, window_bounds = array<i64: 1, 128>}, {transform_indices = @transform_5, window_bounds = array<i64: 8, 128>}]} {
    %c0 = arith.constant 0 : index
    %c0_0 = arith.constant 0 : index
    %0 = vector.load %arg1[%c0, %c0_0] : memref<8x16xf32, #tpu.memory_space<vmem>>, vector<8x16xf32>
    %1 = arith.truncf %0 : vector<8x16xf32> to vector<8x16xbf16>
    %c0_1 = arith.constant 0 : index
    %c0_2 = arith.constant 0 : index
    %2 = vector.load %arg2[%c0_1, %c0_2] : memref<32x16xbf16, #tpu.memory_space<vmem>>, vector<32x16xbf16>
    %cst = arith.constant dense<0.000000e+00> : vector<8x32xf32>
    %3 = tpu.matmul %1, %2, %cst {dimension_numbers = #tpu.dot_dimension_numbers<[1], [1], [0], [0], [0, 0, 1, 0], [], []>} : vector<8x16xbf16>, vector<32x16xbf16>, vector<8x32xf32> -> vector<8x32xf32>
    %c0_3 = arith.constant 0 : index
    %c0_4 = arith.constant 0 : index
    %4 = vector.load %arg3[%c0_3, %c0_4] : memref<1x32xf32, #tpu.memory_space<vmem>>, vector<1x32xf32>
    %5 = vector.broadcast %4 : vector<1x32xf32> to vector<8x32xf32>
    %6 = arith.addf %3, %5 : vector<8x32xf32>
    %cst_5 = arith.constant 0.000000e+00 : f32
    %7 = vector.broadcast %cst_5 : f32 to vector<8x32xf32>
    %8 = arith.maximumf %6, %7 : vector<8x32xf32>
    %9 = arith.truncf %8 : vector<8x32xf32> to vector<8x32xbf16>
    %c0_6 = arith.constant 0 : index
    %c0_7 = arith.constant 0 : index
    %10 = vector.load %arg4[%c0_6, %c0_7] : memref<128x32xbf16, #tpu.memory_space<vmem>>, vector<128x32xbf16>
    %cst_8 = arith.constant dense<0.000000e+00> : vector<8x128xf32>
    %11 = tpu.matmul %9, %10, %cst_8 {dimension_numbers = #tpu.dot_dimension_numbers<[1], [1], [0], [0], [0, 0, 1, 0], [], []>} : vector<8x32xbf16>, vector<128x32xbf16>, vector<8x128xf32> -> vector<8x128xf32>
    %c0_9 = arith.constant 0 : index
    %c0_10 = arith.constant 0 : index
    %12 = vector.load %arg5[%c0_9, %c0_10] : memref<1x128xf32, #tpu.memory_space<vmem>>, vector<1x128xf32>
    %13 = vector.broadcast %12 : vector<1x128xf32> to vector<8x128xf32>
    %14 = arith.addf %11, %13 : vector<8x128xf32>
    %c0_11 = arith.constant 0 : index
    %c0_12 = arith.constant 0 : index
    %15 = vector.load %arg6[%c0_11, %c0_12] : memref<8x128xf32, #tpu.memory_space<vmem>>, vector<8x128xf32>
    tpu.vector_store %arg6[%c0_11, %c0_12], %14 {strides = array<i32>} : memref<8x128xf32, #tpu.memory_space<vmem>>, vector<8x128xf32>,
    return
  }
  func.func @transform_0(%arg0: i32) -> (i32, i32) {
    %c0_i32 = arith.constant 0 : i32
    %c0_i32_0 = arith.constant 0 : i32
    return %arg0, %c0_i32 : i32, i32
  }
  func.func @transform_1(%arg0: i32) -> (i32, i32) {
    %c0_i32 = arith.constant 0 : i32
    %c0_i32_0 = arith.constant 0 : i32
    %c0_i32_1 = arith.constant 0 : i32
    return %c0_i32, %c0_i32_0 : i32, i32
  }
  func.func @transform_2(%arg0: i32) -> (i32, i32) {
    %c0_i32 = arith.constant 0 : i32
    %c0_i32_0 = arith.constant 0 : i32
    %c0_i32_1 = arith.constant 0 : i32
    return %c0_i32, %c0_i32_0 : i32, i32
  }
  func.func @transform_3(%arg0: i32) -> (i32, i32) {
    %c0_i32 = arith.constant 0 : i32
    %c0_i32_0 = arith.constant 0 : i32
    %c0_i32_1 = arith.constant 0 : i32
    return %c0_i32, %c0_i32_0 : i32, i32
  }
  func.func @transform_4(%arg0: i32) -> (i32, i32) {
    %c0_i32 = arith.constant 0 : i32
    %c0_i32_0 = arith.constant 0 : i32
    %c0_i32_1 = arith.constant 0 : i32
    return %c0_i32, %c0_i32_0 : i32, i32
  }
  func.func @transform_5(%arg0: i32) -> (i32, i32) {
    %c0_i32 = arith.constant 0 : i32
    %c0_i32_0 = arith.constant 0 : i32
    return %arg0, %c0_i32 : i32, i32
  }
}

</mosaic_0001>

<llo_original>
// kernel: tpu_custom_call.1
$region0: #{tpu_custom_call.1}
  #allocation0 [shape = 'u32[]', space=smem, size = 0x4, offset = 0x4, fixed_abs, tag = 'smem constant byte address 0x4 - core index']
  #allocation1 [shape = 'u32[144,128]{1,0:T(1,128)}', space=vmem, size = 0x12000, scoped, tag = 'internal scratch']
  %s0 = inlined_call_operand.vmem [shape: f32[8,16], index: 0, kind: input, shape index: {}]
  %s1 = inlined_call_operand.vmem [shape: bf16[32,16], index: 1, kind: input, shape index: {}]
  %s2 = inlined_call_operand.vmem [shape: f32[1,32], index: 2, kind: input, shape index: {}]
  %s3 = inlined_call_operand.vmem [shape: bf16[128,32], index: 3, kind: input, shape index: {}]
  %s4 = inlined_call_operand.vmem [shape: f32[1,128], index: 4, kind: input, shape index: {}]
  %s5 = inlined_call_operand.hbm [shape: f32[8,128], index: 5, kind: output, shape index: {}]
  %s6 = sld [smem:[#allocation0]]
  $region30: #{tpu_custom_call.1} parent=0
    _
  %s8 = ssub.s32 1, %s6
  %s9 = scalar_select 0, %s8, %s6
  $region1: #{tpu_custom_call.1} parent=0
    #allocation2 [shape = 'u8[4096]{0}', space=vmem, size = 0x1000, scoped, tag = 'output window, operand 0, single buffered']
    #allocation3 [shape = 's32[1]{0}', space=sflag, size = 0x4, scoped, tag = 'scoped memory for tpu_custom_call.1']
    %10 = vsyncpa [#allocation3], 0
    // Predicated region
    $region2: #{tpu_custom_call.1} parent=1 // pred_check
      _
    $region3: #{tpu_custom_call.1} parent=1 // pred_check_branch
      %12 = sbr.rel (0) target = $region5
    $region4: #{tpu_custom_call.1} parent=1 // pred_region
      _
    $region5: #{tpu_custom_call.1} parent=1 // pred_fallthru
      _
    // Predicated region
    $region6: #{tpu_custom_call.1} parent=1 // pred_check
      _
    $region7: #{tpu_custom_call.1} parent=1 // pred_check_branch
      %14 = sbr.rel (0) target = $region9
    $region8: #{tpu_custom_call.1} parent=1 // pred_region
      _
    $region9: #{tpu_custom_call.1} parent=1 // pred_fallthru
      _
    // Predicated region
    $region10: #{tpu_custom_call.1} parent=1 // pred_check
      _
    $region11: #{tpu_custom_call.1} parent=1 // pred_check_branch
      %16 = sbr.rel (0) target = $region13
    $region12: #{tpu_custom_call.1} parent=1 // pred_region
      _
    $region13: #{tpu_custom_call.1} parent=1 // pred_fallthru
      _
    // Predicated region
    $region14: #{tpu_custom_call.1} parent=1 // pred_check
      _
    $region15: #{tpu_custom_call.1} parent=1 // pred_check_branch
      %18 = sbr.rel (0) target = $region17
    $region16: #{tpu_custom_call.1} parent=1 // pred_region
      _
    $region17: #{tpu_custom_call.1} parent=1 // pred_fallthru
      _
    // Predicated region
    $region18: #{tpu_custom_call.1} parent=1 // pred_check
      _
    $region19: #{tpu_custom_call.1} parent=1 // pred_check_branch
      %20 = sbr.rel (0) target = $region21
    $region20: #{tpu_custom_call.1} parent=1 // pred_region
      _
    $region21: #{tpu_custom_call.1} parent=1 // pred_fallthru
      _
    %v22 = vld [vmem:[%s0] sm:$0xff]
    %v23 = vpack.c.bf16 %v22, %v22
    %v24 = vld [vmem:[%s1] sm:$0xf]
    %v25 = vld [vmem:[%s1 + $0x4] sm:$0xf]
    %v26 = vld [vmem:[%s1 + $0x8] sm:$0xf]
    %v27 = vld [vmem:[%s1 + $0xc] sm:$0xf]
    %v28 = vld [vmem:[%s2] sm:$0x1]
    %v30 = vlaneseq
    %v31 = vshrl.u32 %v30, 7
    %v32 = vsub.s32 0, %v31
    %v33 = vrot.slane %v28, %v32
    %v39 = vunpack.c.l.b16 %v24
    %v40 = vunpack.c.l.b16 %v25
    %v41 = vunpack.c.l.b16 %v26
    %v42 = vunpack.c.l.b16 %v27
    %v43 = vpack.c.b16 %v40, %v39
    %v44 = vpack.c.b16 %v42, %v41
    %vm45 = vcmask 130048
    %v47 = vsel %vm45, %v23, 0
    %v50 = vsel %vm45, %v43, 0
    %v53 = vsel %vm45, %v44, 0
    %55 = vmatprep.subr.bf16.mxu0 0
    %56 = vmatpush1.bf16.xpose.msra.mxu0 0
    %57 = vmatprep.subr.bf16.mxu0 0
    %58 = vmatpush1.bf16.xpose.msra.mxu0 0
    %59 = vmatprep.subr.bf16.mxu0 0
    %60 = vmatpush1.bf16.xpose.msra.mxu0 0
    %61 = vmatprep.subr.bf16.mxu0 0
    %62 = vmatpush1.bf16.xpose.msra.mxu0 0
    %63 = vmatprep.subr.bf16.mxu0 0
    %64 = vmatpush1.bf16.xpose.msra.mxu0 0
    %65 = vmatprep.subr.bf16.mxu0 0
    %66 = vmatpush1.bf16.xpose.msra.mxu0 0
    %67 = vmatprep.subr.bf16.mxu0 0
    %68 = vmatpush1.bf16.xpose.msra.mxu0 %v53
    %69 = vmatprep.subr.bf16.mxu0 0
    %70 = vmatpush1.bf16.xpose.msra.mxu0 %v50
    %71 = vmatprep.subr.bf16.mxu0 0
    %72 = vmatpush2.bf16.xpose.msra.mxu0 0
    %73 = vmatprep.subr.bf16.mxu0 0
    %74 = vmatpush2.bf16.xpose.msra.mxu0 0
    %75 = vmatprep.subr.bf16.mxu0 0
    %76 = vmatpush2.bf16.xpose.msra.mxu0 0
    %77 = vmatprep.subr.bf16.mxu0 0
    %78 = vmatpush2.bf16.xpose.msra.mxu0 0
    %79 = vmatprep.subr.bf16.mxu0 0
    %80 = vmatpush2.bf16.xpose.msra.mxu0 0
    %81 = vmatprep.subr.bf16.mxu0 0
    %82 = vmatpush2.bf16.xpose.msra.mxu0 0
    %83 = vmatprep.subr.bf16.mxu0 0
    %84 = vmatpush2.bf16.xpose.msra.mxu0 0
    %85 = vmatprep.subr.bf16.mxu0 0
    %86 = vmatpush2.bf16.xpose.msra.mxu0 0
    %87 = vmatprep.mubr.bf16.mxu0 0
    %88 = vmatmul.mubr.bf16.gmra.mxu0 %v47
    %v89 = vpop.f32.mrf.mxu0
    %v90 = vadd.f32 %v33, %v89
    %v91 = vpop.f32.mrf.mxu0
    %v92 = vpop.f32.mrf.mxu0
    %v93 = vpop.f32.mrf.mxu0
    %94 = vdwg.mxu0
    %v95 = vmax.f32 %v90, 0.0
    %v96 = vpack.c.bf16 %v95, %v95
    %v97 = vld [vmem:[%s3] sm:$0xf]
    %v98 = vld [vmem:[%s3 + $0x4] sm:$0xf]
    %v99 = vld [vmem:[%s3 + $0x8] sm:$0xf]
    %v100 = vld [vmem:[%s3 + $0xc] sm:$0xf]
    %v101 = vld [vmem:[%s3 + $0x10] sm:$0xf]
    %v102 = vld [vmem:[%s3 + $0x14] sm:$0xf]
    %v103 = vld [vmem:[%s3 + $0x18] sm:$0xf]
    %v104 = vld [vmem:[%s3 + $0x1c] sm:$0xf]
    %v105 = vld [vmem:[%s3 + $0x20] sm:$0xf]
    %v106 = vld [vmem:[%s3 + $0x24] sm:$0xf]
    %v107 = vld [vmem:[%s3 + $0x28] sm:$0xf]
    %v108 = vld [vmem:[%s3 + $0x2c] sm:$0xf]
    %v109 = vld [vmem:[%s3 + $0x30] sm:$0xf]
    %v110 = vld [vmem:[%s3 + $0x34] sm:$0xf]
    %v111 = vld [vmem:[%s3 + $0x38] sm:$0xf]
    %v112 = vld [vmem:[%s3 + $0x3c] sm:$0xf]
    %v113 = vld [vmem:[%s4] sm:$0x1]
    %v115 = vlaneseq
    %v116 = vshrl.u32 %v115, 7
    %v117 = vsub.s32 0, %v116
    %v118 = vrot.slane %v113, %v117
    %v136 = vunpack.c.l.b16 %v97
    %v137 = vunpack.c.l.b16 %v98
    %v138 = vunpack.c.l.b16 %v99
    %v139 = vunpack.c.l.b16 %v100
    %v140 = vunpack.c.l.b16 %v101
    %v141 = vunpack.c.l.b16 %v102
    %v142 = vunpack.c.l.b16 %v103
    %v143 = vunpack.c.l.b16 %v104
    %v144 = vunpack.c.l.b16 %v105
    %v145 = vunpack.c.l.b16 %v106
    %v146 = vunpack.c.l.b16 %v107
    %v147 = vunpack.c.l.b16 %v108
    %v148 = vunpack.c.l.b16 %v109
    %v149 = vunpack.c.l.b16 %v110
    %v150 = vunpack.c.l.b16 %v111
    %v151 = vunpack.c.l.b16 %v112
    %v152 = vpack.c.b16 %v137, %v136
    %v153 = vpack.c.b16 %v139, %v138
    %v154 = vpack.c.b16 %v141, %v140
    %v155 = vpack.c.b16 %v143, %v142
    %v156 = vpack.c.b16 %v145, %v144
    %v157 = vpack.c.b16 %v147, %v146
    %v158 = vpack.c.b16 %v149, %v148
    %v159 = vpack.c.b16 %v151, %v150
    %vm160 = vcmask 261120
    %v162 = vsel %vm160, %v96, 0
    %v165 = vsel %vm160, %v152, 0
    %v168 = vsel %vm160, %v153, 0
    %v171 = vsel %vm160, %v154, 0
    %v174 = vsel %vm160, %v155, 0
    %v177 = vsel %vm160, %v156, 0
    %v180 = vsel %vm160, %v157, 0
    %v183 = vsel %vm160, %v158, 0
    %v186 = vsel %vm160, %v159, 0
    %188 = vmatprep.subr.bf16.mxu0 0
    %189 = vmatpush1.bf16.xpose.msra.mxu0 %v186
    %190 = vmatprep.subr.bf16.mxu0 0
    %191 = vmatpush1.bf16.xpose.msra.mxu0 %v183
    %192 = vmatprep.subr.bf16.mxu0 0
    %193 = vmatpush1.bf16.xpose.msra.mxu0 %v180
    %194 = vmatprep.subr.bf16.mxu0 0
    %195 = vmatpush1.bf16.xpose.msra.mxu0 %v177
    %196 = vmatprep.subr.bf16.mxu0 0
    %197 = vmatpush1.bf16.xpose.msra.mxu0 %v174
    %198 = vmatprep.subr.bf16.mxu0 0
    %199 = vmatpush1.bf16.xpose.msra.mxu0 %v171
    %200 = vmatprep.subr.bf16.mxu0 0
    %201 = vmatpush1.bf16.xpose.msra.mxu0 %v168
    %202 = vmatprep.subr.bf16.mxu0 0
    %203 = vmatpush1.bf16.xpose.msra.mxu0 %v165
    %204 = vmatprep.subr.bf16.mxu0 0
    %205 = vmatpush2.bf16.xpose.msra.mxu0 0
    %206 = vmatprep.subr.bf16.mxu0 0
    %207 = vmatpush2.bf16.xpose.msra.mxu0 0
    %208 = vmatprep.subr.bf16.mxu0 0
    %209 = vmatpush2.bf16.xpose.msra.mxu0 0
    %210 = vmatprep.subr.bf16.mxu0 0
    %211 = vmatpush2.bf16.xpose.msra.mxu0 0
    %212 = vmatprep.subr.bf16.mxu0 0
    %213 = vmatpush2.bf16.xpose.msra.mxu0 0
    %214 = vmatprep.subr.bf16.mxu0 0
    %215 = vmatpush2.bf16.xpose.msra.mxu0 0
    %216 = vmatprep.subr.bf16.mxu0 0
    %217 = vmatpush2.bf16.xpose.msra.mxu0 0
    %218 = vmatprep.subr.bf16.mxu0 0
    %219 = vmatpush2.bf16.xpose.msra.mxu0 0
    %220 = vmatprep.mubr.bf16.mxu0 0
    %221 = vmatmul.mubr.bf16.gmra.mxu0 %v162
    %v222 = vpop.f32.mrf.mxu0
    %v223 = vadd.f32 %v118, %v222
    %v224 = vpop.f32.mrf.mxu0
    %v225 = vpop.f32.mrf.mxu0
    %v226 = vpop.f32.mrf.mxu0
    %227 = vdwg.mxu0
    %228 = vst [vmem:[#allocation2] sm:$0xff] %v223
    // Predicated region
    $region22: #{tpu_custom_call.1} parent=1 // pred_check
      _
    $region23: #{tpu_custom_call.1} parent=1 // pred_check_branch
      %230 = sbr.rel (0) target = $region25
    $region24: #{tpu_custom_call.1} parent=1 // pred_region
      %s232 = ssub.s32 128, 128
      %233 = vsyncadd [#allocation3], %s232
      %s235 = sshll.u32 [#allocation2], 4
      %s236 = int_to_ptr.vmem [resolvable:$true] %s235
      %238 = dma.vmem_to_hbm [thread:$0]  %s236, 128, %s5, [#allocation3]
    $region25: #{tpu_custom_call.1} parent=1 // pred_fallthru
      _
    // Predicated region
    $region26: #{tpu_custom_call.1} parent=1 // pred_check
      _
    $region27: #{tpu_custom_call.1} parent=1 // pred_check_branch
      %240 = sbr.rel (0) target = $region29
    $region28: #{tpu_custom_call.1} parent=1 // pred_region
      %241 = dma.done [#allocation3], 128
    $region29: #{tpu_custom_call.1} parent=1 // pred_fallthru
      _
    %242 = vsyncpa [#allocation3], 1

</llo_original>
